<compile_context>
chip_gen: v6e
topology: v6e:2x2x1
jax: 0.10.0
libtpu: 0.0.40
codegen_flags: <defaults>
</compile_context>

<pallas_src>
import functools

import jax
import jax.numpy as jnp
from jax.experimental import pallas as pl
from jax.experimental.pallas import tpu as pltpu

_ONEHOT_MAX_VOCAB = 1024   # multi-hot MXU path for fused vocab up to this size
_DEF_TILE_ROWS = 512       # (b, s) positions per grid step (Path A)
_DEF_TILE_N = 1024         # lookups per grid step (Paths B / C)
_NSEM = 32                 # DMA semaphore ring depth (Path C)


def _vmem_budget_bytes():
    """Per-generation VMEM budget (half of capacity, leaving pipeline headroom)."""
    try:
        cap = int(pltpu.get_tpu_info().vmem_capacity_bytes)
    except Exception:
        cap = 64 << 20  # conservative: v7x per-TensorCore VMEM
    return cap // 2


# ---------------------------------------------------------------------------
# Path A: VMEM-resident block-diagonal table + multi-hot MXU matmul.
# ---------------------------------------------------------------------------
def _onehot_kernel(gidx_ref, table_ref, out_ref, *, n_feat, vocab):
    # gidx_ref:  [tile_rows, F] int32 (VMEM)  -- global fused-table row ids
    # table_ref: [vocab, F*D]  f32   (VMEM, resident across the grid)
    # out_ref:   [tile_rows, F*D] f32
    rows = out_ref.shape[0]
    g = gidx_ref[...]                                              # [rows, F]
    iota_v = jax.lax.broadcasted_iota(jnp.int32, (rows, vocab), 1)
    mh = jnp.zeros((rows, vocab), dtype=jnp.float32)
    for f in range(n_feat):                      # static, F is small
        mh = mh + (g[:, f:f + 1] == iota_v).astype(jnp.float32)
    out_ref[...] = jnp.dot(
        mh, table_ref[...].astype(jnp.float32),
        precision=jax.lax.Precision.HIGHEST,     # exact for a 0/1 left operand
        preferred_element_type=jnp.float32,
    ).astype(out_ref.dtype)


def _embed_onehot(gidx2d, table, offsets, budget):
    R, F = gidx2d.shape
    V, D = table.shape
    FD = F * D

    # Block-diagonal fused table: row v only populates its feature's D columns.
    row_feat = jnp.searchsorted(
        offsets, jnp.arange(V, dtype=jnp.int32), side="right") - 1      # [V]
    mask = (row_feat[:, None] ==
            jnp.arange(F, dtype=jnp.int32)[None, :]).astype(table.dtype)  # [V,F]
    table_bd = (mask[:, :, None] * table[:, None, :]).reshape(V, FD)

    # Zero-pad the contraction dim to a sublane multiple so MXU padding is exact.
    Vp = pl.cdiv(V, 8) * 8
    if Vp != V:
        table_bd = jnp.pad(table_bd, ((0, Vp - V), (0, 0)))

    tile_rows = min(_DEF_TILE_ROWS, pl.cdiv(R, 8) * 8)
    R_pad = pl.cdiv(R, tile_rows) * tile_rows
    if R_pad != R:
        gidx2d = jnp.pad(gidx2d, ((0, R_pad - R), (0, 0)))

    params = dict(dimension_semantics=("parallel",))
    vmem_need = (Vp * FD * 4 + 2 * tile_rows * FD * 4
                 + 2 * tile_rows * F * 4 + tile_rows * Vp * 4)
    if vmem_need > (12 << 20):
        params["vmem_limit_bytes"] = min(int(vmem_need * 1.5) + (4 << 20),
                                         budget * 2)

    kernel = functools.partial(_onehot_kernel, n_feat=F, vocab=Vp)
    return pl.pallas_call(
        kernel,
        out_shape=jax.ShapeDtypeStruct((R_pad, FD), table.dtype),
        grid=(R_pad // tile_rows,),
        in_specs=[
            pl.BlockSpec((tile_rows, F), lambda r: (r, 0)),
            pl.BlockSpec((Vp, FD), lambda r: (0, 0)),   # resident table
        ],
        out_specs=pl.BlockSpec((tile_rows, FD), lambda r: (r, 0)),
        compiler_params=pltpu.CompilerParams(**params),
    )(gidx2d, table_bd)


# ---------------------------------------------------------------------------
# Path B: VMEM-resident table, per-row gather with vector loads.
# ---------------------------------------------------------------------------
def _vmem_gather_kernel(idx_ref, table_ref, out_ref):
    # idx_ref:  [tile] int32 (SMEM block), table_ref: [V, D] (VMEM resident),
    # out_ref:  [tile, D]
    # TODO(synk): lane-pack 128 // D rows per output row when 128 % D == 0.
    def body(i, carry):
        out_ref[pl.ds(i, 1), :] = table_ref[pl.ds(idx_ref[i], 1), :]
        return carry
    jax.lax.fori_loop(0, out_ref.shape[0], body, 0, unroll=8)


def _embed_vmem_gather(flat_idx, table, budget, tile_n=_DEF_TILE_N):
    N = flat_idx.shape[0]
    V, D = table.shape
    tile = min(tile_n, pl.cdiv(N, 8) * 8)
    n_pad = pl.cdiv(N, tile) * tile
    if n_pad != N:
        flat_idx = jnp.pad(flat_idx, (0, n_pad - N))

    params = dict(dimension_semantics=("parallel",))
    vmem_need = V * D * 4 + 2 * tile * D * 4
    if vmem_need > (12 << 20):
        params["vmem_limit_bytes"] = min(int(vmem_need * 1.5) + (4 << 20),
                                         budget * 2)
    return pl.pallas_call(
        _vmem_gather_kernel,
        out_shape=jax.ShapeDtypeStruct((n_pad, D), table.dtype),
        grid=(n_pad // tile,),
        in_specs=[
            pl.BlockSpec((tile,), lambda t: (t,),
                         memory_space=pltpu.MemorySpace.SMEM),
            pl.BlockSpec((V, D), lambda t: (0, 0)),     # resident table
        ],
        out_specs=pl.BlockSpec((tile, D), lambda t: (t, 0)),
        compiler_params=pltpu.CompilerParams(**params),
    )(flat_idx, table)


# ---------------------------------------------------------------------------
# Path C: HBM table, per-row DMA gather (large-table fallback).
# ---------------------------------------------------------------------------
def _hbm_gather_kernel(idx_ref, table_hbm, out_ref, sem, *, tile, nsem):
    # idx_ref:   [tile] int32 in SMEM (blocked per grid step)
    # table_hbm: [V, D] f32 left in HBM (memory_space=pl.ANY)
    # out_ref:   [tile, D] VMEM output block
    # sem:       DMA semaphore ring (nsem,)
    def _copy(i, row):
        return pltpu.make_async_copy(
            table_hbm.at[pl.ds(row, 1), :],
            out_ref.at[pl.ds(i, 1), :],
            sem.at[i % nsem])

    @pl.loop(0, nsem)
    def _(i):
        _copy(i, idx_ref[i]).start()

    def steady(i, carry):
        _copy(i - nsem, 0).wait()            # shape + slot are what matter
        _copy(i, idx_ref[i]).start()
        return carry
    jax.lax.fori_loop(nsem, tile, steady, 0, unroll=8)

    @pl.loop(tile - nsem, tile)
    def _(i):
        _copy(i, 0).wait()


def _embed_hbm_gather(flat_idx, table, tile_n=_DEF_TILE_N, nsem=_NSEM):
    N = flat_idx.shape[0]
    V, D = table.shape
    tile = max(nsem, min(tile_n, pl.cdiv(N, 8) * 8))
    n_pad = pl.cdiv(N, tile) * tile
    if n_pad != N:
        flat_idx = jnp.pad(flat_idx, (0, n_pad - N))

    kernel = functools.partial(_hbm_gather_kernel, tile=tile, nsem=nsem)
    return pl.pallas_call(
        kernel,
        out_shape=jax.ShapeDtypeStruct((n_pad, D), table.dtype),
        grid=(n_pad // tile,),
        in_specs=[
            pl.BlockSpec((tile,), lambda t: (t,),
                         memory_space=pltpu.MemorySpace.SMEM),
            pl.BlockSpec(memory_space=pl.ANY),          # table stays in HBM
        ],
        out_specs=pl.BlockSpec((tile, D), lambda t: (t, 0)),
        scratch_shapes=[pltpu.SemaphoreType.DMA((nsem,))],
        compiler_params=pltpu.CompilerParams(
            dimension_semantics=("parallel",)),
    )(flat_idx, table)


# ---------------------------------------------------------------------------
# Top-level forward: fused table + offsets -> [B, S, F, D]
# ---------------------------------------------------------------------------
@jax.jit
def cate_feature_embedding(indices, table, offsets):
    """indices: [B, S, F] int, table: [V_total, D] f32, offsets: [F] int32."""
    B, S, F = indices.shape
    V, D = table.shape
    budget = _vmem_budget_bytes()

    # Clamp each feature's indices to its valid range so no lookup can go OOB.
    sizes = jnp.concatenate([offsets[1:], jnp.array([V], jnp.int32)]) - offsets
    local = jnp.clip(indices.astype(jnp.int32), 0, sizes - 1)
    gidx = local + offsets                     # [B, S, F] fused-table row ids

    R = B * S
    bd_bytes = V * (F * D) * 4
    tbl_bytes = V * D * 4

    if V <= _ONEHOT_MAX_VOCAB and bd_bytes <= budget // 2:
        out2d = _embed_onehot(gidx.reshape(R, F), table, offsets, budget)
        return out2d[:R].reshape(B, S, F, D)

    flat = gidx.reshape(-1)
    if tbl_bytes <= budget // 2:
        out = _embed_vmem_gather(flat, table, budget)
    else:
        out = _embed_hbm_gather(flat, table)
    return out[:flat.shape[0]].reshape(B, S, F, D)


# ---------------------------------------------------------------------------
# Parameter construction + pure-JAX reference
# ---------------------------------------------------------------------------
def make_params(key, cate_list, d_embed):
    """One table per categorical feature, fused row-wise with per-feature offsets."""
    keys = jax.random.split(key, len(cate_list))
    tables = [jax.random.normal(k, (num, d_embed), dtype=jnp.float32)
              for k, num in zip(keys, cate_list)]
    fused = jnp.concatenate(tables, axis=0)                 # [sum(cate_list), D]
    offsets = jnp.array(
        [0] + list(jnp.cumsum(jnp.array(cate_list[:-1])).tolist()),
        dtype=jnp.int32)
    return fused, offsets, tables


def reference(indices, tables):
    outs = []
    for f, tbl in enumerate(tables):
        outs.append(tbl[indices[:, :, f]][:, :, None, :])    # [B, S, 1, D]
    return jnp.concatenate(outs, axis=2)                     # [B, S, F, D]


if __name__ == "__main__":
    key = jax.random.PRNGKey(0)
    k_param, k_idx = jax.random.split(key)

    B, S, d_embed = 2, 8, 32
    cate_list = [7, 5, 11]
    F = len(cate_list)

    fused_table, offsets, tables = make_params(k_param, cate_list, d_embed)

    idx_cols = []
    for num in cate_list:
        k_idx, sub = jax.random.split(k_idx)
        idx_cols.append(jax.random.randint(sub, (B, S, 1), 0, num, dtype=jnp.int32))
    indices = jnp.concatenate(idx_cols, axis=2)               # [B, S, F]

    out = cate_feature_embedding(indices, fused_table, offsets)
    out = jax.block_until_ready(out)

    ref = reference(indices, tables)
    assert out.shape == (B, S, F, d_embed), out.shape
    assert jnp.allclose(out, ref, atol=1e-6, rtol=1e-6), "mismatch vs reference"

    print("KERNEL_OK")
</pallas_src>

<mosaic_0001>
module attributes {stable_mosaic.version = 11 : i64} {
  func.func @_onehot_kernel(%arg0: i32, %arg1: memref<16x3xi32, #tpu.memory_space<vmem>>, %arg2: memref<24x96xf32, #tpu.memory_space<vmem>>, %arg3: memref<16x96xf32, #tpu.memory_space<vmem>>) attributes {dimension_semantics = [#tpu.dimension_semantics<parallel>], iteration_bounds = array<i64: 1>, scalar_prefetch = 0 : i64, scratch_operands = 0 : i64, tpu.core_type = #tpu.core_type<tc>, window_params = [{transform_indices = @transform_0, window_bounds = array<i64: 16, 3>}, {pipeline_mode = #tpu.pipeline_mode<synchronous>, transform_indices = @transform_1, window_bounds = array<i64: 24, 96>}, {transform_indices = @transform_2, window_bounds = array<i64: 16, 96>}]} {
    %c0 = arith.constant 0 : index
    %c0_0 = arith.constant 0 : index
    %0 = vector.load %arg1[%c0, %c0_0] : memref<16x3xi32, #tpu.memory_space<vmem>>, vector<16x3xi32>
    %1 = tpu.iota {dimensions = array<i32: 1>} : vector<16x24xi32>
    %cst = arith.constant 0.000000e+00 : f32
    %2 = vector.broadcast %cst : f32 to vector<16x24xf32>
    %3 = vector.extract_strided_slice %0 {offsets = [0, 0], sizes = [16, 1], strides = [1, 1]} : vector<16x3xi32> to vector<16x1xi32>
    %4 = vector.broadcast %3 : vector<16x1xi32> to vector<16x24xi32>
    %5 = arith.cmpi eq, %4, %1 : vector<16x24xi32>
    %6 = arith.extui %5 : vector<16x24xi1> to vector<16x24xi32>
    %7 = arith.sitofp %6 : vector<16x24xi32> to vector<16x24xf32>
    %8 = arith.addf %2, %7 : vector<16x24xf32>
    %9 = vector.extract_strided_slice %0 {offsets = [0, 1], sizes = [16, 1], strides = [1, 1]} : vector<16x3xi32> to vector<16x1xi32>
    %10 = vector.broadcast %9 : vector<16x1xi32> to vector<16x24xi32>
    %11 = arith.cmpi eq, %10, %1 : vector<16x24xi32>
    %12 = arith.extui %11 : vector<16x24xi1> to vector<16x24xi32>
    %13 = arith.sitofp %12 : vector<16x24xi32> to vector<16x24xf32>
    %14 = arith.addf %8, %13 : vector<16x24xf32>
    %15 = vector.extract_strided_slice %0 {offsets = [0, 2], sizes = [16, 1], strides = [1, 1]} : vector<16x3xi32> to vector<16x1xi32>
    %16 = vector.broadcast %15 : vector<16x1xi32> to vector<16x24xi32>
    %17 = arith.cmpi eq, %16, %1 : vector<16x24xi32>
    %18 = arith.extui %17 : vector<16x24xi1> to vector<16x24xi32>
    %19 = arith.sitofp %18 : vector<16x24xi32> to vector<16x24xf32>
    %20 = arith.addf %14, %19 : vector<16x24xf32>
    %c0_1 = arith.constant 0 : index
    %c0_2 = arith.constant 0 : index
    %21 = vector.load %arg2[%c0_1, %c0_2] : memref<24x96xf32, #tpu.memory_space<vmem>>, vector<24x96xf32>
    %cst_3 = arith.constant dense<0.000000e+00> : vector<16x96xf32>
    %22 = tpu.matmul %20, %21, %cst_3 {dimension_numbers = #tpu.dot_dimension_numbers<[1], [0], [0], [1], [0, 0, 1, 1], [], []>, precision = #tpu.contract_precision<fp32>} : vector<16x24xf32>, vector<24x96xf32>, vector<16x96xf32> -> vector<16x96xf32>
    %c0_4 = arith.constant 0 : index
    %c0_5 = arith.constant 0 : index
    %23 = vector.load %arg3[%c0_4, %c0_5] : memref<16x96xf32, #tpu.memory_space<vmem>>, vector<16x96xf32>
    tpu.vector_store %arg3[%c0_4, %c0_5], %22 {strides = array<i32>} : memref<16x96xf32, #tpu.memory_space<vmem>>, vector<16x96xf32>,
    return
  }
  func.func @transform_0(%arg0: i32) -> (i32, i32) {
    %c0_i32 = arith.constant 0 : i32
    %c0_i32_0 = arith.constant 0 : i32
    return %arg0, %c0_i32 : i32, i32
  }
  func.func @transform_1(%arg0: i32) -> (i32, i32) {
    %c0_i32 = arith.constant 0 : i32
    %c0_i32_0 = arith.constant 0 : i32
    %c0_i32_1 = arith.constant 0 : i32
    return %c0_i32, %c0_i32_0 : i32, i32
  }
  func.func @transform_2(%arg0: i32) -> (i32, i32) {
    %c0_i32 = arith.constant 0 : i32
    %c0_i32_0 = arith.constant 0 : i32
    return %arg0, %c0_i32 : i32, i32
  }
}

</mosaic_0001>

<llo_original>
// kernel: custom-call
$region0: #{custom-call}
  %s0 = inlined_call_operand.vmem [shape: u32[23], index: 0, kind: output, shape index: {}]

// kernel: cate_feature_embedding.1
$region0: #{cate_feature_embedding.1}
  #allocation0 [shape = 'u32[]', space=smem, size = 0x4, offset = 0x4, fixed_abs, tag = 'smem constant byte address 0x4 - core index']
  #allocation1 [shape = 'u32[144,128]{1,0:T(1,128)}', space=vmem, size = 0x12000, scoped, tag = 'internal scratch']
  %s0 = inlined_call_operand.vmem [shape: s32[16,3], index: 0, kind: input, shape index: {}]
  %s1 = inlined_call_operand.vmem [shape: f32[24,96], index: 1, kind: input, shape index: {}]
  %s2 = inlined_call_operand.vmem [shape: f32[16,96], index: 2, kind: output, shape index: {}]
  %s3 = sld [smem:[#allocation0]]
  $region18: #{cate_feature_embedding.1} parent=0
    _
  %s5 = ssub.s32 1, %s3
  %s6 = scalar_select 0, %s5, %s3
  // Predicated region
  $region2: #{cate_feature_embedding.1} parent=0 // pred_check
    _
  $region3: #{cate_feature_embedding.1} parent=0 // pred_check_branch
    %8 = sbr.rel (0) target = $region5
  $region4: #{cate_feature_embedding.1} parent=0 // pred_region
    _
  $region5: #{cate_feature_embedding.1} parent=0 // pred_fallthru
    _
  // Predicated region
  $region6: #{cate_feature_embedding.1} parent=0 // pred_check
    _
  $region7: #{cate_feature_embedding.1} parent=0 // pred_check_branch
    %10 = sbr.rel (0) target = $region9
  $region8: #{cate_feature_embedding.1} parent=0 // pred_region
    _
  $region9: #{cate_feature_embedding.1} parent=0 // pred_fallthru
    _
  %v11 = vld [vmem:[%s0] sm:$0xff]
  %v12 = vld [vmem:[%s0 + $0x8] sm:$0xff]
  %v13 = vlaneseq
  %v14 = vand.u32 %v13, 127
  %15 = vset.pattern.permute.xlu0 0
  %16 = vperm.xlu0 %15, %v11
  %v17 = vpop.permute.xlu0 %16
  %18 = vset.pattern.permute.xlu0 0
  %19 = vperm.xlu0 %18, %v12
  %v20 = vpop.permute.xlu0 %19
  %vm21 = vcmp.eq.s32.totalorder %v17, %v14
  %vm22 = vcmp.eq.s32.totalorder %v20, %v14
  %v23 = vsel %vm21, 1, 0
  %v24 = vsel %vm22, 1, 0
  %v25 = vcvt.s32.f32 %v23
  %v26 = vcvt.s32.f32 %v24
  %v27 = vadd.f32 %v25, 0.0
  %v28 = vadd.f32 %v26, 0.0
  %29 = vset.pattern.permute.xlu0 1
  %30 = vperm.xlu0 %29, %v11
  %v31 = vpop.permute.xlu0 %30
  %32 = vset.pattern.permute.xlu0 1
  %33 = vperm.xlu0 %32, %v12
  %v34 = vpop.permute.xlu0 %33
  %vm35 = vcmp.eq.s32.totalorder %v31, %v14
  %vm36 = vcmp.eq.s32.totalorder %v34, %v14
  %v37 = vsel %vm35, 1, 0
  %v38 = vsel %vm36, 1, 0
  %v39 = vcvt.s32.f32 %v37
  %v40 = vcvt.s32.f32 %v38
  %v41 = vadd.f32 %v27, %v39
  %v42 = vadd.f32 %v28, %v40
  %43 = vset.pattern.permute.xlu0 2
  %44 = vperm.xlu0 %43, %v11
  %v45 = vpop.permute.xlu0 %44
  %46 = vset.pattern.permute.xlu0 2
  %47 = vperm.xlu0 %46, %v12
  %v48 = vpop.permute.xlu0 %47
  %vm49 = vcmp.eq.s32.totalorder %v45, %v14
  %vm50 = vcmp.eq.s32.totalorder %v48, %v14
  %v51 = vsel %vm49, 1, 0
  %v52 = vsel %vm50, 1, 0
  %v53 = vcvt.s32.f32 %v51
  %v54 = vcvt.s32.f32 %v52
  %v55 = vadd.f32 %v41, %v53
  %v56 = vadd.f32 %v42, %v54
  %v57 = vld [vmem:[%s1] sm:$0xff]
  %v58 = vld [vmem:[%s1 + $0x8] sm:$0xff]
  %v59 = vld [vmem:[%s1 + $0x10] sm:$0xff]
  %vm60 = vcmask 195584
  %v62 = vsel %vm60, %v55, 0
  %v65 = vsel %vm60, %v56, 0
  %67 = vmatprep.subr.mxu0 0.0
  %68 = vmatpush1.msra.mxu0 0.0
  %69 = vmatprep.subr.mxu0 0.0
  %70 = vmatpush1.msra.mxu0 0.0
  %71 = vmatprep.subr.mxu0 0.0
  %72 = vmatpush1.msra.mxu0 0.0
  %73 = vmatprep.subr.mxu0 0.0
  %74 = vmatpush1.msra.mxu0 0.0
  %75 = vmatprep.subr.mxu0 0.0
  %76 = vmatpush1.msra.mxu0 0.0
  %77 = vmatprep.subr.mxu0 0.0
  %78 = vmatpush1.msra.mxu0 0.0
  %79 = vmatprep.subr.mxu0 0.0
  %80 = vmatpush1.msra.mxu0 0.0
  %81 = vmatprep.subr.mxu0 0.0
  %82 = vmatpush1.msra.mxu0 0.0
  %83 = vmatprep.subr.mxu0 0.0
  %84 = vmatpush1.msra.mxu0 0.0
  %85 = vmatprep.subr.mxu0 0.0
  %86 = vmatpush1.msra.mxu0 0.0
  %87 = vmatprep.subr.mxu0 0.0
  %88 = vmatpush1.msra.mxu0 0.0
  %89 = vmatprep.subr.mxu0 0.0
  %90 = vmatpush1.msra.mxu0 0.0
  %91 = vmatprep.subr.mxu0 0.0
  %92 = vmatpush1.msra.mxu0 0.0
  %93 = vmatprep.subr.mxu0 0.0
  %v94 = vand.u32 %v59, 4294901760
  %95 = vmatpush1.msra.mxu0 %v94
  %96 = vmatprep.subr.mxu0 0.0
  %v97 = vand.u32 %v58, 4294901760
  %98 = vmatpush1.msra.mxu0 %v97
  %99 = vmatprep.subr.mxu0 0.0
  %v100 = vand.u32 %v57, 4294901760
  %101 = vmatpush1.msra.mxu0 %v100
  %102 = vmatprep.subr.mxu0 0.0
  %103 = vmatpush2.msra.mxu0 0.0
  %104 = vmatprep.subr.mxu0 0.0
  %105 = vmatpush2.msra.mxu0 0.0
  %106 = vmatprep.subr.mxu0 0.0
  %107 = vmatpush2.msra.mxu0 0.0
  %108 = vmatprep.subr.mxu0 0.0
  %109 = vmatpush2.msra.mxu0 0.0
  %110 = vmatprep.subr.mxu0 0.0
  %111 = vmatpush2.msra.mxu0 0.0
  %112 = vmatprep.subr.mxu0 0.0
  %113 = vmatpush2.msra.mxu0 0.0
  %114 = vmatprep.subr.mxu0 0.0
  %115 = vmatpush2.msra.mxu0 0.0
  %116 = vmatprep.subr.mxu0 0.0
  %117 = vmatpush2.msra.mxu0 0.0
  %118 = vmatprep.subr.mxu0 0.0
  %119 = vmatpush2.msra.mxu0 0.0
  %120 = vmatprep.subr.mxu0 0.0
  %121 = vmatpush2.msra.mxu0 0.0
  %122 = vmatprep.subr.mxu0 0.0
  %123 = vmatpush2.msra.mxu0 0.0
  %124 = vmatprep.subr.mxu0 0.0
  %125 = vmatpush2.msra.mxu0 0.0
  %126 = vmatprep.subr.mxu0 0.0
  %127 = vmatpush2.msra.mxu0 0.0
  %128 = vmatprep.subr.mxu0 0.0
  %129 = vmatpush2.msra.mxu0 0.0
  %130 = vmatprep.subr.mxu0 0.0
  %131 = vmatpush2.msra.mxu0 0.0
  %132 = vmatprep.subr.mxu0 0.0
  %133 = vmatpush2.msra.mxu0 0.0
  %134 = vmatprep.mubr.f32.mxu0 0.0
  %v135 = vand.u32 %v62, 4294901760
  %v136 = vsub.f32 %v62, %v135
  %v137 = vand.u32 %v136, 4294901760
  %v138 = vsub.f32 %v136, %v137
  %v139 = vand.u32 %v138, 4294901760
  %140 = vmatmul.mubr.f32.gmra.mxu0 %v139
  %v141 = vpop.f32.mrf.mxu0
  %v142 = vadd.f32 0.0, %v141
  %v143 = vpop.f32.mrf.mxu0
  %144 = vmatprep.mubr.f32.mxu0 0.0
  %v145 = vand.u32 %v65, 4294901760
  %v146 = vsub.f32 %v65, %v145
  %v147 = vand.u32 %v146, 4294901760
  %v148 = vsub.f32 %v146, %v147
  %v149 = vand.u32 %v148, 4294901760
  %150 = vmatmul.mubr.f32.gmra.mxu0 %v149
  %v151 = vpop.f32.mrf.mxu0
  %v152 = vadd.f32 0.0, %v151
  %v153 = vpop.f32.mrf.mxu0
  %154 = vdwg.mxu0
  %155 = vmatprep.subr.mxu0 0.0
  %156 = vmatpush1.msra.mxu0 0.0
  %157 = vmatprep.subr.mxu0 0.0
  %158 = vmatpush1.msra.mxu0 0.0
  %159 = vmatprep.subr.mxu0 0.0
  %160 = vmatpush1.msra.mxu0 0.0
  %161 = vmatprep.subr.mxu0 0.0
  %162 = vmatpush1.msra.mxu0 0.0
  %163 = vmatprep.subr.mxu0 0.0
  %164 = vmatpush1.msra.mxu0 0.0
  %165 = vmatprep.subr.mxu0 0.0
  %166 = vmatpush1.msra.mxu0 0.0
  %167 = vmatprep.subr.mxu0 0.0
  %168 = vmatpush1.msra.mxu0 0.0
  %169 = vmatprep.subr.mxu0 0.0
  %170 = vmatpush1.msra.mxu0 0.0
  %171 = vmatprep.subr.mxu0 0.0
  %172 = vmatpush1.msra.mxu0 0.0
  %173 = vmatprep.subr.mxu0 0.0
  %174 = vmatpush1.msra.mxu0 0.0
  %175 = vmatprep.subr.mxu0 0.0
  %176 = vmatpush1.msra.mxu0 0.0
  %177 = vmatprep.subr.mxu0 0.0
  %178 = vmatpush1.msra.mxu0 0.0
  %179 = vmatprep.subr.mxu0 0.0
  %180 = vmatpush1.msra.mxu0 0.0
  %181 = vmatprep.subr.mxu0 0.0
  %v182 = vand.u32 %v59, 4294901760
  %v183 = vsub.f32 %v59, %v182
  %v184 = vand.u32 %v183, 4294901760
  %v185 = vsub.f32 %v183, %v184
  %v186 = vand.u32 %v185, 4294901760
  %187 = vmatpush1.msra.mxu0 %v186
  %188 = vmatprep.subr.mxu0 0.0
  %v189 = vand.u32 %v58, 4294901760
  %v190 = vsub.f32 %v58, %v189
  %v191 = vand.u32 %v190, 4294901760
  %v192 = vsub.f32 %v190, %v191
  %v193 = vand.u32 %v192, 4294901760
  %194 = vmatpush1.msra.mxu0 %v193
  %195 = vmatprep.subr.mxu0 0.0
  %v196 = vand.u32 %v57, 4294901760
  %v197 = vsub.f32 %v57, %v196
  %v198 = vand.u32 %v197, 4294901760
  %v199 = vsub.f32 %v197, %v198
  %v200 = vand.u32 %v199, 4294901760
  %201 = vmatpush1.msra.mxu0 %v200
  %202 = vmatprep.subr.mxu0 0.0
  %203 = vmatpush2.msra.mxu0 0.0
  %204 = vmatprep.subr.mxu0 0.0
  %205 = vmatpush2.msra.mxu0 0.0
  %206 = vmatprep.subr.mxu0 0.0
  %207 = vmatpush2.msra.mxu0 0.0
  %208 = vmatprep.subr.mxu0 0.0
  %209 = vmatpush2.msra.mxu0 0.0
  %210 = vmatprep.subr.mxu0 0.0
  %211 = vmatpush2.msra.mxu0 0.0
  %212 = vmatprep.subr.mxu0 0.0
  %213 = vmatpush2.msra.mxu0 0.0
  %214 = vmatprep.subr.mxu0 0.0
  %215 = vmatpush2.msra.mxu0 0.0
  %216 = vmatprep.subr.mxu0 0.0
  %217 = vmatpush2.msra.mxu0 0.0
  %218 = vmatprep.subr.mxu0 0.0
  %219 = vmatpush2.msra.mxu0 0.0
  %220 = vmatprep.subr.mxu0 0.0
  %221 = vmatpush2.msra.mxu0 0.0
  %222 = vmatprep.subr.mxu0 0.0
  %223 = vmatpush2.msra.mxu0 0.0
  %224 = vmatprep.subr.mxu0 0.0
  %225 = vmatpush2.msra.mxu0 0.0
  %226 = vmatprep.subr.mxu0 0.0
  %227 = vmatpush2.msra.mxu0 0.0
  %228 = vmatprep.subr.mxu0 0.0
  %229 = vmatpush2.msra.mxu0 0.0
  %230 = vmatprep.subr.mxu0 0.0
  %231 = vmatpush2.msra.mxu0 0.0
  %232 = vmatprep.subr.mxu0 0.0
  %233 = vmatpush2.msra.mxu0 0.0
  %234 = vmatprep.mubr.f32.mxu0 0.0
  %v235 = vand.u32 %v62, 4294901760
  %236 = vmatmul.mubr.f32.gmra.mxu0 %v235
  %v237 = vpop.f32.mrf.mxu0
  %v238 = vadd.f32 %v142, %v237
  %v239 = vpop.f32.mrf.mxu0
  %240 = vmatprep.mubr.f32.mxu0 0.0
  %v241 = vand.u32 %v65, 4294901760
  %242 = vmatmul.mubr.f32.gmra.mxu0 %v241
  %v243 = vpop.f32.mrf.mxu0
  %v244 = vadd.f32 %v152, %v243
  %v245 = vpop.f32.mrf.mxu0
  %246 = vdwg.mxu0
  %247 = vmatprep.subr.mxu0 0.0
  %248 = vmatpush1.msra.mxu0 0.0
  %249 = vmatprep.subr.mxu0 0.0
  %250 = vmatpush1.msra.mxu0 0.0
  %251 = vmatprep.subr.mxu0 0.0
  %252 = vmatpush1.msra.mxu0 0.0
  %253 = vmatprep.subr.mxu0 0.0
  %254 = vmatpush1.msra.mxu0 0.0
  %255 = vmatprep.subr.mxu0 0.0
  %256 = vmatpush1.msra.mxu0 0.0
  %257 = vmatprep.subr.mxu0 0.0
  %258 = vmatpush1.msra.mxu0 0.0
  %259 = vmatprep.subr.mxu0 0.0
  %260 = vmatpush1.msra.mxu0 0.0
  %261 = vmatprep.subr.mxu0 0.0
  %262 = vmatpush1.msra.mxu0 0.0
  %263 = vmatprep.subr.mxu0 0.0
  %264 = vmatpush1.msra.mxu0 0.0
  %265 = vmatprep.subr.mxu0 0.0
  %266 = vmatpush1.msra.mxu0 0.0
  %267 = vmatprep.subr.mxu0 0.0
  %268 = vmatpush1.msra.mxu0 0.0
  %269 = vmatprep.subr.mxu0 0.0
  %270 = vmatpush1.msra.mxu0 0.0
  %271 = vmatprep.subr.mxu0 0.0
  %272 = vmatpush1.msra.mxu0 0.0
  %273 = vmatprep.subr.mxu0 0.0
  %v274 = vand.u32 %v59, 4294901760
  %v275 = vsub.f32 %v59, %v274
  %276 = vmatpush1.msra.mxu0 %v275
  %277 = vmatprep.subr.mxu0 0.0
  %v278 = vand.u32 %v58, 4294901760
  %v279 = vsub.f32 %v58, %v278
  %280 = vmatpush1.msra.mxu0 %v279
  %281 = vmatprep.subr.mxu0 0.0
  %v282 = vand.u32 %v57, 4294901760
  %v283 = vsub.f32 %v57, %v282
  %284 = vmatpush1.msra.mxu0 %v283
  %285 = vmatprep.subr.mxu0 0.0
  %286 = vmatpush2.msra.mxu0 0.0
  %287 = vmatprep.subr.mxu0 0.0
  %288 = vmatpush2.msra.mxu0 0.0
  %289 = vmatprep.subr.mxu0 0.0
  %290 = vmatpush2.msra.mxu0 0.0
  %291 = vmatprep.subr.mxu0 0.0
  %292 = vmatpush2.msra.mxu0 0.0
  %293 = vmatprep.subr.mxu0 0.0
  %294 = vmatpush2.msra.mxu0 0.0
  %295 = vmatprep.subr.mxu0 0.0
  %296 = vmatpush2.msra.mxu0 0.0
  %297 = vmatprep.subr.mxu0 0.0
  %298 = vmatpush2.msra.mxu0 0.0
  %299 = vmatprep.subr.mxu0 0.0
  %300 = vmatpush2.msra.mxu0 0.0
  %301 = vmatprep.subr.mxu0 0.0
  %302 = vmatpush2.msra.mxu0 0.0
  %303 = vmatprep.subr.mxu0 0.0
  %304 = vmatpush2.msra.mxu0 0.0
  %305 = vmatprep.subr.mxu0 0.0
  %306 = vmatpush2.msra.mxu0 0.0
  %307 = vmatprep.subr.mxu0 0.0
  %308 = vmatpush2.msra.mxu0 0.0
  %309 = vmatprep.subr.mxu0 0.0
  %310 = vmatpush2.msra.mxu0 0.0
  %311 = vmatprep.subr.mxu0 0.0
  %312 = vmatpush2.msra.mxu0 0.0
  %313 = vmatprep.subr.mxu0 0.0
  %314 = vmatpush2.msra.mxu0 0.0
  %315 = vmatprep.subr.mxu0 0.0
  %316 = vmatpush2.msra.mxu0 0.0
  %317 = vmatprep.mubr.f32.mxu0 0.0
  %v318 = vand.u32 %v62, 4294901760
  %v319 = vsub.f32 %v62, %v318
  %320 = vmatmul.mubr.f32.gmra.mxu0 %v319
  %v321 = vpop.f32.mrf.mxu0
  %v322 = vadd.f32 %v238, %v321
  %v323 = vpop.f32.mrf.mxu0
  %324 = vmatprep.mubr.f32.mxu0 0.0
  %v325 = vand.u32 %v65, 4294901760
  %v326 = vsub.f32 %v65, %v325
  %327 = vmatmul.mubr.f32.gmra.mxu0 %v326
  %v328 = vpop.f32.mrf.mxu0
  %v329 = vadd.f32 %v244, %v328
  %v330 = vpop.f32.mrf.mxu0
  %331 = vdwg.mxu0
  %332 = vmatprep.subr.mxu0 0.0
  %333 = vmatpush1.msra.mxu0 0.0
  %334 = vmatprep.subr.mxu0 0.0
  %335 = vmatpush1.msra.mxu0 0.0
  %336 = vmatprep.subr.mxu0 0.0
  %337 = vmatpush1.msra.mxu0 0.0
  %338 = vmatprep.subr.mxu0 0.0
  %339 = vmatpush1.msra.mxu0 0.0
  %340 = vmatprep.subr.mxu0 0.0
  %341 = vmatpush1.msra.mxu0 0.0
  %342 = vmatprep.subr.mxu0 0.0
  %343 = vmatpush1.msra.mxu0 0.0
  %344 = vmatprep.subr.mxu0 0.0
  %345 = vmatpush1.msra.mxu0 0.0
  %346 = vmatprep.subr.mxu0 0.0
  %347 = vmatpush1.msra.mxu0 0.0
  %348 = vmatprep.subr.mxu0 0.0
  %349 = vmatpush1.msra.mxu0 0.0
  %350 = vmatprep.subr.mxu0 0.0
  %351 = vmatpush1.msra.mxu0 0.0
  %352 = vmatprep.subr.mxu0 0.0
  %353 = vmatpush1.msra.mxu0 0.0
  %354 = vmatprep.subr.mxu0 0.0
  %355 = vmatpush1.msra.mxu0 0.0
  %356 = vmatprep.subr.mxu0 0.0
  %357 = vmatpush1.msra.mxu0 0.0
  %358 = vmatprep.subr.mxu0 0.0
  %v359 = vand.u32 %v59, 4294901760
  %360 = vmatpush1.msra.mxu0 %v359
  %361 = vmatprep.subr.mxu0 0.0
  %v362 = vand.u32 %v58, 4294901760
  %363 = vmatpush1.msra.mxu0 %v362
  %364 = vmatprep.subr.mxu0 0.0
  %v365 = vand.u32 %v57, 4294901760
  %366 = vmatpush1.msra.mxu0 %v365
  %367 = vmatprep.subr.mxu0 0.0
  %368 = vmatpush2.msra.mxu0 0.0
  %369 = vmatprep.subr.mxu0 0.0
  %370 = vmatpush2.msra.mxu0 0.0
  %371 = vmatprep.subr.mxu0 0.0
  %372 = vmatpush2.msra.mxu0 0.0
  %373 = vmatprep.subr.mxu0 0.0
  %374 = vmatpush2.msra.mxu0 0.0
  %375 = vmatprep.subr.mxu0 0.0
  %376 = vmatpush2.msra.mxu0 0.0
  %377 = vmatprep.subr.mxu0 0.0
  %378 = vmatpush2.msra.mxu0 0.0
  %379 = vmatprep.subr.mxu0 0.0
  %380 = vmatpush2.msra.mxu0 0.0
  %381 = vmatprep.subr.mxu0 0.0
  %382 = vmatpush2.msra.mxu0 0.0
  %383 = vmatprep.subr.mxu0 0.0
  %384 = vmatpush2.msra.mxu0 0.0
  %385 = vmatprep.subr.mxu0 0.0
  %386 = vmatpush2.msra.mxu0 0.0
  %387 = vmatprep.subr.mxu0 0.0
  %388 = vmatpush2.msra.mxu0 0.0
  %389 = vmatprep.subr.mxu0 0.0
  %390 = vmatpush2.msra.mxu0 0.0
  %391 = vmatprep.subr.mxu0 0.0
  %392 = vmatpush2.msra.mxu0 0.0
  %393 = vmatprep.subr.mxu0 0.0
  %394 = vmatpush2.msra.mxu0 0.0
  %395 = vmatprep.subr.mxu0 0.0
  %396 = vmatpush2.msra.mxu0 0.0
  %397 = vmatprep.subr.mxu0 0.0
  %398 = vmatpush2.msra.mxu0 0.0
  %399 = vmatprep.mubr.f32.mxu0 0.0
  %v400 = vand.u32 %v62, 4294901760
  %v401 = vsub.f32 %v62, %v400
  %v402 = vand.u32 %v401, 4294901760
  %403 = vmatmul.mubr.f32.gmra.mxu0 %v402
  %v404 = vpop.f32.mrf.mxu0
  %v405 = vadd.f32 %v322, %v404
  %v406 = vpop.f32.mrf.mxu0
  %407 = vmatprep.mubr.f32.mxu0 0.0
  %v408 = vand.u32 %v65, 4294901760
  %v409 = vsub.f32 %v65, %v408
  %v410 = vand.u32 %v409, 4294901760
  %411 = vmatmul.mubr.f32.gmra.mxu0 %v410
  %v412 = vpop.f32.mrf.mxu0
  %v413 = vadd.f32 %v329, %v412
  %v414 = vpop.f32.mrf.mxu0
  %415 = vdwg.mxu0
  %416 = vmatprep.subr.mxu0 0.0
  %417 = vmatpush1.msra.mxu0 0.0
  %418 = vmatprep.subr.mxu0 0.0
  %419 = vmatpush1.msra.mxu0 0.0
  %420 = vmatprep.subr.mxu0 0.0
  %421 = vmatpush1.msra.mxu0 0.0
  %422 = vmatprep.subr.mxu0 0.0
  %423 = vmatpush1.msra.mxu0 0.0
  %424 = vmatprep.subr.mxu0 0.0
  %425 = vmatpush1.msra.mxu0 0.0
  %426 = vmatprep.subr.mxu0 0.0
  %427 = vmatpush1.msra.mxu0 0.0
  %428 = vmatprep.subr.mxu0 0.0
  %429 = vmatpush1.msra.mxu0 0.0
  %430 = vmatprep.subr.mxu0 0.0
  %431 = vmatpush1.msra.mxu0 0.0
  %432 = vmatprep.subr.mxu0 0.0
  %433 = vmatpush1.msra.mxu0 0.0
  %434 = vmatprep.subr.mxu0 0.0
  %435 = vmatpush1.msra.mxu0 0.0
  %436 = vmatprep.subr.mxu0 0.0
  %437 = vmatpush1.msra.mxu0 0.0
  %438 = vmatprep.subr.mxu0 0.0
  %439 = vmatpush1.msra.mxu0 0.0
  %440 = vmatprep.subr.mxu0 0.0
  %441 = vmatpush1.msra.mxu0 0.0
  %442 = vmatprep.subr.mxu0 0.0
  %v443 = vand.u32 %v59, 4294901760
  %v444 = vsub.f32 %v59, %v443
  %v445 = vand.u32 %v444, 4294901760
  %446 = vmatpush1.msra.mxu0 %v445
  %447 = vmatprep.subr.mxu0 0.0
  %v448 = vand.u32 %v58, 4294901760
  %v449 = vsub.f32 %v58, %v448
  %v450 = vand.u32 %v449, 4294901760
  %451 = vmatpush1.msra.mxu0 %v450
  %452 = vmatprep.subr.mxu0 0.0
  %v453 = vand.u32 %v57, 4294901760
  %v454 = vsub.f32 %v57, %v453
  %v455 = vand.u32 %v454, 4294901760
  %456 = vmatpush1.msra.mxu0 %v455
  %457 = vmatprep.subr.mxu0 0.0
  %458 = vmatpush2.msra.mxu0 0.0
  %459 = vmatprep.subr.mxu0 0.0
  %460 = vmatpush2.msra.mxu0 0.0
  %461 = vmatprep.subr.mxu0 0.0
  %462 = vmatpush2.msra.mxu0 0.0
  %463 = vmatprep.subr.mxu0 0.0
  %464 = vmatpush2.msra.mxu0 0.0
  %465 = vmatprep.subr.mxu0 0.0
  %466 = vmatpush2.msra.mxu0 0.0
  %467 = vmatprep.subr.mxu0 0.0
  %468 = vmatpush2.msra.mxu0 0.0
  %469 = vmatprep.subr.mxu0 0.0
  %470 = vmatpush2.msra.mxu0 0.0
  %471 = vmatprep.subr.mxu0 0.0
  %472 = vmatpush2.msra.mxu0 0.0
  %473 = vmatprep.subr.mxu0 0.0
  %474 = vmatpush2.msra.mxu0 0.0
  %475 = vmatprep.subr.mxu0 0.0
  %476 = vmatpush2.msra.mxu0 0.0
  %477 = vmatprep.subr.mxu0 0.0
  %478 = vmatpush2.msra.mxu0 0.0
  %479 = vmatprep.subr.mxu0 0.0
  %480 = vmatpush2.msra.mxu0 0.0
  %481 = vmatprep.subr.mxu0 0.0
  %482 = vmatpush2.msra.mxu0 0.0
  %483 = vmatprep.subr.mxu0 0.0
  %484 = vmatpush2.msra.mxu0 0.0
  %485 = vmatprep.subr.mxu0 0.0
  %486 = vmatpush2.msra.mxu0 0.0
  %487 = vmatprep.subr.mxu0 0.0
  %488 = vmatpush2.msra.mxu0 0.0
  %489 = vmatprep.mubr.f32.mxu0 0.0
  %v490 = vand.u32 %v62, 4294901760
  %491 = vmatmul.mubr.f32.gmra.mxu0 %v490
  %v492 = vpop.f32.mrf.mxu0
  %v493 = vadd.f32 %v405, %v492
  %v494 = vpop.f32.mrf.mxu0
  %495 = vmatprep.mubr.f32.mxu0 0.0
  %v496 = vand.u32 %v65, 4294901760
  %497 = vmatmul.mubr.f32.gmra.mxu0 %v496
  %v498 = vpop.f32.mrf.mxu0
  %v499 = vadd.f32 %v413, %v498
  %v500 = vpop.f32.mrf.mxu0
  %501 = vdwg.mxu0
  %502 = vmatprep.subr.mxu0 0.0
  %503 = vmatpush1.msra.mxu0 0.0
  %504 = vmatprep.subr.mxu0 0.0
  %505 = vmatpush1.msra.mxu0 0.0
  %506 = vmatprep.subr.mxu0 0.0
  %507 = vmatpush1.msra.mxu0 0.0
  %508 = vmatprep.subr.mxu0 0.0
  %509 = vmatpush1.msra.mxu0 0.0
  %510 = vmatprep.subr.mxu0 0.0
  %511 = vmatpush1.msra.mxu0 0.0
  %512 = vmatprep.subr.mxu0 0.0
  %513 = vmatpush1.msra.mxu0 0.0
  %514 = vmatprep.subr.mxu0 0.0
  %515 = vmatpush1.msra.mxu0 0.0
  %516 = vmatprep.subr.mxu0 0.0
  %517 = vmatpush1.msra.mxu0 0.0
  %518 = vmatprep.subr.mxu0 0.0
  %519 = vmatpush1.msra.mxu0 0.0
  %520 = vmatprep.subr.mxu0 0.0
  %521 = vmatpush1.msra.mxu0 0.0
  %522 = vmatprep.subr.mxu0 0.0
  %523 = vmatpush1.msra.mxu0 0.0
  %524 = vmatprep.subr.mxu0 0.0
  %525 = vmatpush1.msra.mxu0 0.0
  %526 = vmatprep.subr.mxu0 0.0
  %527 = vmatpush1.msra.mxu0 0.0
  %528 = vmatprep.subr.mxu0 0.0
  %v529 = vand.u32 %v59, 4294901760
  %530 = vmatpush1.msra.mxu0 %v529
  %531 = vmatprep.subr.mxu0 0.0
  %v532 = vand.u32 %v58, 4294901760
  %533 = vmatpush1.msra.mxu0 %v532
  %534 = vmatprep.subr.mxu0 0.0
  %v535 = vand.u32 %v57, 4294901760
  %536 = vmatpush1.msra.mxu0 %v535
  %537 = vmatprep.subr.mxu0 0.0
  %538 = vmatpush2.msra.mxu0 0.0
  %539 = vmatprep.subr.mxu0 0.0
  %540 = vmatpush2.msra.mxu0 0.0
  %541 = vmatprep.subr.mxu0 0.0
  %542 = vmatpush2.msra.mxu0 0.0
  %543 = vmatprep.subr.mxu0 0.0
  %544 = vmatpush2.msra.mxu0 0.0
  %545 = vmatprep.subr.mxu0 0.0
  %546 = vmatpush2.msra.mxu0 0.0
  %547 = vmatprep.subr.mxu0 0.0
  %548 = vmatpush2.msra.mxu0 0.0
  %549 = vmatprep.subr.mxu0 0.0
  %550 = vmatpush2.msra.mxu0 0.0
  %551 = vmatprep.subr.mxu0 0.0
  %552 = vmatpush2.msra.mxu0 0.0
  %553 = vmatprep.subr.mxu0 0.0
  %554 = vmatpush2.msra.mxu0 0.0
  %555 = vmatprep.subr.mxu0 0.0
  %556 = vmatpush2.msra.mxu0 0.0
  %557 = vmatprep.subr.mxu0 0.0
  %558 = vmatpush2.msra.mxu0 0.0
  %559 = vmatprep.subr.mxu0 0.0
  %560 = vmatpush2.msra.mxu0 0.0
  %561 = vmatprep.subr.mxu0 0.0
  %562 = vmatpush2.msra.mxu0 0.0
  %563 = vmatprep.subr.mxu0 0.0
  %564 = vmatpush2.msra.mxu0 0.0
  %565 = vmatprep.subr.mxu0 0.0
  %566 = vmatpush2.msra.mxu0 0.0
  %567 = vmatprep.subr.mxu0 0.0
  %568 = vmatpush2.msra.mxu0 0.0
  %569 = vmatprep.mubr.f32.mxu0 0.0
  %v570 = vand.u32 %v62, 4294901760
  %571 = vmatmul.mubr.f32.gmra.mxu0 %v570
  %v572 = vpop.f32.mrf.mxu0
  %v573 = vadd.f32 %v493, %v572
  %v574 = vpop.f32.mrf.mxu0
  %575 = vmatprep.mubr.f32.mxu0 0.0
  %v576 = vand.u32 %v65, 4294901760
  %577 = vmatmul.mubr.f32.gmra.mxu0 %v576
  %v578 = vpop.f32.mrf.mxu0
  %v579 = vadd.f32 %v499, %v578
  %v580 = vpop.f32.mrf.mxu0
  %581 = vdwg.mxu0
  %vm582 = vcmask 785408
  %583 = vst.msk [vmem:[%s2] sm:$0xff] %vm582, %v573
  %584 = vst.msk [vmem:[%s2 + $0x8] sm:$0xff] %vm582, %v579
  // Predicated region
  $region10: #{cate_feature_embedding.1} parent=0 // pred_check
    _
  $region11: #{cate_feature_embedding.1} parent=0 // pred_check_branch
    %586 = sbr.rel (0) target = $region13
  $region12: #{cate_feature_embedding.1} parent=0 // pred_region
    _
  $region13: #{cate_feature_embedding.1} parent=0 // pred_fallthru
    _
  // Predicated region
  $region14: #{cate_feature_embedding.1} parent=0 // pred_check
    _
  $region15: #{cate_feature_embedding.1} parent=0 // pred_check_branch
    %588 = sbr.rel (0) target = $region17
  $region16: #{cate_feature_embedding.1} parent=0 // pred_region
    _
  $region17: #{cate_feature_embedding.1} parent=0 // pred_fallthru
    _

</llo_original>
